<compile_context>
chip_gen: v6e
topology: v6e:2x2x1
jax: 0.10.0
libtpu: 0.0.40
codegen_flags: <defaults>
</compile_context>

<pallas_src>
import jax
import jax.numpy as jnp
from jax.experimental import pallas as pl
from jax.experimental.pallas import tpu as pltpu

EPS = 1e-5
VMEM_LIMIT = 48 * 1024 * 1024        # safe under v7x's 64 MiB per-TC VMEM
FUSED_Y_LIMIT = 24 * 1024 * 1024     # max bytes for the full-y VMEM scratch


def _round_up(x, m):
    return ((x + m - 1) // m) * m


def _pick_tm(M):
    """Row-tile size: multiple of 16 (bf16 sublanes), minimal padding, few grid steps."""
    OVERHEAD_ROWS = 48               # ~0.35us/step expressed in rows of f32x1024 HBM traffic
    hi = min(512, _round_up(M, 16))
    cands = list(range(16, hi + 1, 16))
    multi = [t for t in cands if pl.cdiv(M, t) >= 2]   # keep >=2 tiles for pipelining
    if multi:
        cands = multi
    best_tm, best_score = None, None
    for tm in cands:
        m_tiles = pl.cdiv(M, tm)
        score = m_tiles * tm + OVERHEAD_ROWS * 2 * m_tiles   # padded rows + step overhead
        if best_score is None or score < best_score:
            best_score, best_tm = score, tm
    return best_tm


# --------------------- Fused kernel: conv + batch stats + BN affine + residual ---------
def _make_fused_kernel(m_true):
    inv_m = 1.0 / float(m_true)      # true element count (padded rows are zero)

    def kernel(x_ref, w_ref, r_ref, gb_ref, o_ref,
               y_ref, sum_ref, sq_ref, scale_ref, shift_ref):
        p = pl.program_id(0)         # phase: 0 = conv + stats, 1 = affine + residual
        i = pl.program_id(1)         # row-tile index
        n_tiles = pl.num_programs(1)

        # ---- phase 0: conv tile -> y scratch, accumulate per-channel stats ----
        @pl.when(p == 0)
        def _compute():
            @pl.when(i == 0)
            def _init():
                sum_ref[...] = jnp.zeros_like(sum_ref)
                sq_ref[...] = jnp.zeros_like(sq_ref)

            y = jnp.dot(x_ref[...], w_ref[...], preferred_element_type=jnp.float32)
            y_ref[i] = y
            sum_ref[...] += jnp.sum(y, axis=0, keepdims=True)
            sq_ref[...] += jnp.sum(y * y, axis=0, keepdims=True)

            # fold stats -> per-channel scale/shift once, in-kernel (rsqrt on EUP)
            @pl.when(i == n_tiles - 1)
            def _fold():
                mean = sum_ref[...] * inv_m
                var = sq_ref[...] * inv_m - mean * mean      # biased var (training-mode BN)
                gamma = gb_ref[0:1, :]
                beta = gb_ref[1:2, :]
                s = gamma * jax.lax.rsqrt(var + EPS)
                scale_ref[...] = s
                shift_ref[...] = beta - mean * s

        # ---- phase 1: y (from VMEM scratch) * scale + shift + residual ----
        @pl.when(p == 1)
        def _apply():
            o_ref[...] = (y_ref[i] * scale_ref[...] + shift_ref[...]
                          + r_ref[...]).astype(o_ref.dtype)

    return kernel


def _fused_path(x2d, w2d, r2d, gb, m_true, tm, m_tiles, C_in, C_out):
    last = m_tiles - 1
    return pl.pallas_call(
        _make_fused_kernel(m_true),
        out_shape=jax.ShapeDtypeStruct((m_tiles * tm, C_out), jnp.float32),
        grid_spec=pltpu.PrefetchScalarGridSpec(
            num_scalar_prefetch=0,
            grid=(2, m_tiles),
            in_specs=[
                # x: streamed during phase 0, held at the last tile during phase 1 (no refetch)
                pl.BlockSpec((tm, C_in), lambda p, i: ((1 - p) * i + p * last, 0)),
                # w: VMEM-resident, fetched once
                pl.BlockSpec((C_in, C_out), lambda p, i: (0, 0)),
                # residual: held at tile 0 during phase 0 (prefetch), streamed during phase 1
                pl.BlockSpec((tm, C_out), lambda p, i: (p * i, 0)),
                # gamma/beta stacked (2, C_out)
                pl.BlockSpec((2, C_out), lambda p, i: (0, 0)),
            ],
            # output only advances during phase 1 -> no garbage writeback in phase 0
            out_specs=pl.BlockSpec((tm, C_out), lambda p, i: (p * i, 0)),
            scratch_shapes=[
                pltpu.VMEM((m_tiles, tm, C_out), jnp.float32),   # full y
                pltpu.VMEM((1, C_out), jnp.float32),             # sum
                pltpu.VMEM((1, C_out), jnp.float32),             # sum of squares
                pltpu.VMEM((1, C_out), jnp.float32),             # scale
                pltpu.VMEM((1, C_out), jnp.float32),             # shift
            ],
        ),
        compiler_params=pltpu.CompilerParams(
            dimension_semantics=("arbitrary", "arbitrary"),
            vmem_limit_bytes=VMEM_LIMIT),
    )(x2d, w2d, r2d, gb)


# --------------------- Two-pass fallback (large M: full y does not fit VMEM) -----------
def _stats_kernel(x_ref, w_ref, stats_ref):
    y = jnp.dot(x_ref[...], w_ref[...], preferred_element_type=jnp.float32)
    stats_ref[...] = jnp.concatenate(
        [jnp.sum(y, axis=0, keepdims=True),
         jnp.sum(y * y, axis=0, keepdims=True)], axis=0)


def _bn_add_kernel(x_ref, w_ref, r_ref, affine_ref, o_ref):
    y = jnp.dot(x_ref[...], w_ref[...], preferred_element_type=jnp.float32)
    o_ref[...] = (y * affine_ref[0:1, :] + affine_ref[1:2, :] + r_ref[...]).astype(o_ref.dtype)


def _two_pass_path(x2d, w2d, r2d, gb, m_true, tm, m_tiles, C_in, C_out):
    # pass 1: per-tile partial stats on a flat, fully-parallel grid (megacore-friendly)
    partial = pl.pallas_call(
        _stats_kernel,
        out_shape=jax.ShapeDtypeStruct((m_tiles, 2, C_out), jnp.float32),
        grid_spec=pltpu.PrefetchScalarGridSpec(
            num_scalar_prefetch=0,
            grid=(m_tiles,),
            in_specs=[
                pl.BlockSpec((tm, C_in), lambda i: (i, 0)),
                pl.BlockSpec((C_in, C_out), lambda i: (0, 0)),
            ],
            out_specs=pl.BlockSpec((None, 2, C_out), lambda i: (i, 0, 0)),
        ),
        compiler_params=pltpu.CompilerParams(
            dimension_semantics=("parallel",),
            vmem_limit_bytes=VMEM_LIMIT),
    )(x2d, w2d)

    stats = jnp.sum(partial, axis=0)                       # (2, C_out)
    mean = stats[0] / m_true
    var = stats[1] / m_true - mean * mean
    scale = gb[0] * jax.lax.rsqrt(var + EPS)
    shift = gb[1] - mean * scale
    affine = jnp.stack([scale, shift], axis=0)             # (2, C_out)

    # pass 2: recompute conv (cheaper than a y HBM round trip), affine + residual
    return pl.pallas_call(
        _bn_add_kernel,
        out_shape=jax.ShapeDtypeStruct((m_tiles * tm, C_out), jnp.float32),
        grid_spec=pltpu.PrefetchScalarGridSpec(
            num_scalar_prefetch=0,
            grid=(m_tiles,),
            in_specs=[
                pl.BlockSpec((tm, C_in), lambda i: (i, 0)),
                pl.BlockSpec((C_in, C_out), lambda i: (0, 0)),
                pl.BlockSpec((tm, C_out), lambda i: (i, 0)),
                pl.BlockSpec((2, C_out), lambda i: (0, 0)),
            ],
            out_specs=pl.BlockSpec((tm, C_out), lambda i: (i, 0)),
        ),
        compiler_params=pltpu.CompilerParams(
            dimension_semantics=("parallel",),
            vmem_limit_bytes=VMEM_LIMIT),
    )(x2d, w2d, r2d, affine)


# --------------------- Wrapper ---------------------------------------------------------
def conv_bn_add(x_nchw, res_nchw, w_oi, gamma, beta, *, force_two_pass=False):
    """x_nchw: (N, C_in, H, W), res_nchw: (N, C_out, H, W), w_oi: (C_out, C_in)."""
    N, C_in, H, W = x_nchw.shape
    C_out = w_oi.shape[0]
    M = N * H * W

    # NCHW -> channels-last 2D (interface glue; see TODO at top of file).
    x2d = jnp.transpose(x_nchw, (0, 2, 3, 1)).reshape(M, C_in).astype(jnp.bfloat16)
    r2d = jnp.transpose(res_nchw, (0, 2, 3, 1)).reshape(M, C_out).astype(jnp.float32)
    w2d = jnp.transpose(w_oi, (1, 0)).astype(jnp.bfloat16)
    gb = jnp.stack([gamma.astype(jnp.float32), beta.astype(jnp.float32)], axis=0)  # (2, C_out)

    # M tiling: multiple of 16, minimal padding (zero rows contribute nothing to stats).
    tm = _pick_tm(M)
    m_tiles = pl.cdiv(M, tm)
    M_pad = m_tiles * tm
    if M_pad != M:
        x2d = jnp.pad(x2d, ((0, M_pad - M), (0, 0)))
        r2d = jnp.pad(r2d, ((0, M_pad - M), (0, 0)))

    y_bytes = M_pad * C_out * 4
    if force_two_pass or y_bytes > FUSED_Y_LIMIT:
        out2d = _two_pass_path(x2d, w2d, r2d, gb, M, tm, m_tiles, C_in, C_out)
    else:
        out2d = _fused_path(x2d, w2d, r2d, gb, M, tm, m_tiles, C_in, C_out)

    out2d = out2d[:M]
    return jnp.transpose(out2d.reshape(N, H, W, C_out), (0, 3, 1, 2))


# --------------------- Reference (plain JAX, f32) ---------------------------------------
def reference(x_nchw, res_nchw, w_oi, gamma, beta):
    N, C_in, H, W = x_nchw.shape
    C_out = w_oi.shape[0]
    x2d = jnp.transpose(x_nchw, (0, 2, 3, 1)).reshape(-1, C_in)
    y2d = x2d @ w_oi.T
    mean = jnp.mean(y2d, axis=0, keepdims=True)
    var = jnp.mean(y2d * y2d, axis=0, keepdims=True) - mean * mean
    yn = (y2d - mean) * jax.lax.rsqrt(var + EPS) * gamma.reshape(1, -1) + beta.reshape(1, -1)
    out2d = yn + jnp.transpose(res_nchw, (0, 2, 3, 1)).reshape(-1, C_out)
    return jnp.transpose(out2d.reshape(N, H, W, C_out), (0, 3, 1, 2))


if __name__ == "__main__":
    # Small shapes consistent with the module (original: N=1, C_in=256, C_out=1024, H=W=28)
    N, C_in, C_out, H, W = 2, 64, 128, 16, 16

    key = jax.random.PRNGKey(0)
    k1, k2, k3, k4, k5 = jax.random.split(key, 5)

    x198 = jax.random.normal(k1, (N, C_in, H, W), jnp.float32)     # conv input
    x192 = jax.random.normal(k2, (N, C_out, H, W), jnp.float32)    # residual

    # Synthetic parameters (shapes from module __init__)
    w_oi = jax.random.normal(k3, (C_out, C_in), jnp.float32) * 0.05   # Conv2d weight (C_out, C_in)
    gamma = 1.0 + 0.1 * jax.random.normal(k4, (C_out,), jnp.float32)  # BN weight
    beta = 0.1 * jax.random.normal(k5, (C_out,), jnp.float32)         # BN bias

    ref = reference(x198, x192, w_oi, gamma, beta)

    # Primary fused path
    out = jax.block_until_ready(conv_bn_add(x198, x192, w_oi, gamma, beta))
    assert out.shape == (N, C_out, H, W)
    max_err = float(jnp.max(jnp.abs(out - ref)))
    # bf16 MXU inputs vs f32 reference -> loose tolerance
    assert max_err < 5e-2, f"fused path mismatch vs reference: max_err={max_err}"

    # Large-M fallback path (exercised here too so it stays verified)
    out2 = jax.block_until_ready(
        conv_bn_add(x198, x192, w_oi, gamma, beta, force_two_pass=True))
    max_err2 = float(jnp.max(jnp.abs(out2 - ref)))
    assert max_err2 < 5e-2, f"two-pass path mismatch vs reference: max_err={max_err2}"

    print("KERNEL_OK")
</pallas_src>

<mosaic_0001>
module attributes {stable_mosaic.version = 11 : i64} {
  func.func @kernel(%arg0: i32, %arg1: i32, %arg2: memref<256x64xbf16, #tpu.memory_space<vmem>>, %arg3: memref<64x128xbf16, #tpu.memory_space<vmem>>, %arg4: memref<256x128xf32, #tpu.memory_space<vmem>>, %arg5: memref<2x128xf32, #tpu.memory_space<vmem>>, %arg6: memref<256x128xf32, #tpu.memory_space<vmem>>, %arg7: memref<2x256x128xf32, #tpu.memory_space<vmem>>, %arg8: memref<1x128xf32, #tpu.memory_space<vmem>>, %arg9: memref<1x128xf32, #tpu.memory_space<vmem>>, %arg10: memref<1x128xf32, #tpu.memory_space<vmem>>, %arg11: memref<1x128xf32, #tpu.memory_space<vmem>>) attributes {dimension_semantics = [#tpu.dimension_semantics<arbitrary>, #tpu.dimension_semantics<arbitrary>], iteration_bounds = array<i64: 2, 2>, scalar_prefetch = 0 : i64, scratch_operands = 5 : i64, tpu.core_type = #tpu.core_type<tc>, window_params = [{transform_indices = @transform_0, window_bounds = array<i64: 256, 64>}, {pipeline_mode = #tpu.pipeline_mode<synchronous>, transform_indices = @transform_1, window_bounds = array<i64: 64, 128>}, {transform_indices = @transform_2, window_bounds = array<i64: 256, 128>}, {pipeline_mode = #tpu.pipeline_mode<synchronous>, transform_indices = @transform_3, window_bounds = array<i64: 2, 128>}, {transform_indices = @transform_4, window_bounds = array<i64: 256, 128>}]} {
    %c0_i32 = arith.constant 0 : i32
    %0 = arith.cmpi eq, %arg0, %c0_i32 : i32
    %1 = arith.extui %0 : i1 to i32
    %c0_i32_0 = arith.constant 0 : i32
    %2 = arith.cmpi ne, %1, %c0_i32_0 : i32
    scf.if %2 {
      %c0_i32_2 = arith.constant 0 : i32
      %6 = arith.cmpi eq, %arg1, %c0_i32_2 : i32
      %7 = arith.extui %6 : i1 to i32
      %c0_i32_3 = arith.constant 0 : i32
      %8 = arith.cmpi ne, %7, %c0_i32_3 : i32
      scf.if %8 {
        %cst_21 = arith.constant 0.000000e+00 : f32
        %30 = vector.broadcast %cst_21 : f32 to vector<1x128xf32>
        %c0_22 = arith.constant 0 : index
        %c0_23 = arith.constant 0 : index
        %31 = vector.load %arg8[%c0_22, %c0_23] : memref<1x128xf32, #tpu.memory_space<vmem>>, vector<1x128xf32>
        tpu.vector_store %arg8[%c0_22, %c0_23], %30 {strides = array<i32>} : memref<1x128xf32, #tpu.memory_space<vmem>>, vector<1x128xf32>,
        %cst_24 = arith.constant 0.000000e+00 : f32
        %32 = vector.broadcast %cst_24 : f32 to vector<1x128xf32>
        %c0_25 = arith.constant 0 : index
        %c0_26 = arith.constant 0 : index
        %33 = vector.load %arg9[%c0_25, %c0_26] : memref<1x128xf32, #tpu.memory_space<vmem>>, vector<1x128xf32>
        tpu.vector_store %arg9[%c0_25, %c0_26], %32 {strides = array<i32>} : memref<1x128xf32, #tpu.memory_space<vmem>>, vector<1x128xf32>,
      } else {
      }
      %c0 = arith.constant 0 : index
      %c0_4 = arith.constant 0 : index
      %9 = vector.load %arg2[%c0, %c0_4] : memref<256x64xbf16, #tpu.memory_space<vmem>>, vector<256x64xbf16>
      %c0_5 = arith.constant 0 : index
      %c0_6 = arith.constant 0 : index
      %10 = vector.load %arg3[%c0_5, %c0_6] : memref<64x128xbf16, #tpu.memory_space<vmem>>, vector<64x128xbf16>
      %cst = arith.constant dense<0.000000e+00> : vector<256x128xf32>
      %11 = tpu.matmul %9, %10, %cst {dimension_numbers = #tpu.dot_dimension_numbers<[1], [0], [0], [1], [0, 0, 1, 1], [], []>} : vector<256x64xbf16>, vector<64x128xbf16>, vector<256x128xf32> -> vector<256x128xf32>
      %12 = arith.index_cast %arg1 : i32 to index
      %c0_7 = arith.constant 0 : index
      %c0_8 = arith.constant 0 : index
      %13 = vector.load %arg7[%12, %c0_7, %c0_8] : memref<2x256x128xf32, #tpu.memory_space<vmem>>, vector<1x256x128xf32>
      %14 = vector.shape_cast %13 : vector<1x256x128xf32> to vector<256x128xf32>
      %15 = vector.shape_cast %11 : vector<256x128xf32> to vector<1x256x128xf32>
      tpu.vector_store %arg7[%12, %c0_7, %c0_8], %15 {strides = array<i32>} : memref<2x256x128xf32, #tpu.memory_space<vmem>>, vector<1x256x128xf32>,
      %c0_9 = arith.constant 0 : index
      %c0_10 = arith.constant 0 : index
      %16 = vector.load %arg8[%c0_9, %c0_10] : memref<1x128xf32, #tpu.memory_space<vmem>>, vector<1x128xf32>
      %cst_11 = arith.constant dense<0.000000e+00> : vector<128xf32>
      %17 = vector.multi_reduction <add>, %11, %cst_11 [0] : vector<256x128xf32> to vector<128xf32>
      %18 = vector.shape_cast %17 : vector<128xf32> to vector<1x128xf32>
      %19 = arith.addf %16, %18 : vector<1x128xf32>
      %c0_12 = arith.constant 0 : index
      %c0_13 = arith.constant 0 : index
      %20 = vector.load %arg8[%c0_12, %c0_13] : memref<1x128xf32, #tpu.memory_space<vmem>>, vector<1x128xf32>
      tpu.vector_store %arg8[%c0_12, %c0_13], %19 {strides = array<i32>} : memref<1x128xf32, #tpu.memory_space<vmem>>, vector<1x128xf32>,
      %c0_14 = arith.constant 0 : index
      %c0_15 = arith.constant 0 : index
      %21 = vector.load %arg9[%c0_14, %c0_15] : memref<1x128xf32, #tpu.memory_space<vmem>>, vector<1x128xf32>
      %22 = arith.mulf %11, %11 : vector<256x128xf32>
      %cst_16 = arith.constant dense<0.000000e+00> : vector<128xf32>
      %23 = vector.multi_reduction <add>, %22, %cst_16 [0] : vector<256x128xf32> to vector<128xf32>
      %24 = vector.shape_cast %23 : vector<128xf32> to vector<1x128xf32>
      %25 = arith.addf %21, %24 : vector<1x128xf32>
      %c0_17 = arith.constant 0 : index
      %c0_18 = arith.constant 0 : index
      %26 = vector.load %arg9[%c0_17, %c0_18] : memref<1x128xf32, #tpu.memory_space<vmem>>, vector<1x128xf32>
      tpu.vector_store %arg9[%c0_17, %c0_18], %25 {strides = array<i32>} : memref<1x128xf32, #tpu.memory_space<vmem>>, vector<1x128xf32>,
      %c1_i32_19 = arith.constant 1 : i32
      %27 = arith.cmpi eq, %arg1, %c1_i32_19 : i32
      %28 = arith.extui %27 : i1 to i32
      %c0_i32_20 = arith.constant 0 : i32
      %29 = arith.cmpi ne, %28, %c0_i32_20 : i32
      scf.if %29 {
        %c0_21 = arith.constant 0 : index
        %c0_22 = arith.constant 0 : index
        %30 = vector.load %arg8[%c0_21, %c0_22] : memref<1x128xf32, #tpu.memory_space<vmem>>, vector<1x128xf32>
        %cst_23 = arith.constant 0.001953125 : f32
        %31 = vector.broadcast %cst_23 : f32 to vector<1x128xf32>
        %32 = arith.mulf %30, %31 : vector<1x128xf32>
        %c0_24 = arith.constant 0 : index
        %c0_25 = arith.constant 0 : index
        %33 = vector.load %arg9[%c0_24, %c0_25] : memref<1x128xf32, #tpu.memory_space<vmem>>, vector<1x128xf32>
        %cst_26 = arith.constant 0.001953125 : f32
        %34 = vector.broadcast %cst_26 : f32 to vector<1x128xf32>
        %35 = arith.mulf %33, %34 : vector<1x128xf32>
        %36 = arith.mulf %32, %32 : vector<1x128xf32>
        %37 = arith.subf %35, %36 : vector<1x128xf32>
        %c0_27 = arith.constant 0 : index
        %c0_28 = arith.constant 0 : index
        %38 = vector.load %arg5[%c0_27, %c0_28] : memref<2x128xf32, #tpu.memory_space<vmem>>, vector<1x128xf32>
        %c1 = arith.constant 1 : index
        %c0_29 = arith.constant 0 : index
        %39 = vector.load %arg5[%c1, %c0_29] : memref<2x128xf32, #tpu.memory_space<vmem>>, vector<1x128xf32>
        %cst_30 = arith.constant 9.99999974E-6 : f32
        %40 = vector.broadcast %cst_30 : f32 to vector<1x128xf32>
        %41 = arith.addf %37, %40 : vector<1x128xf32>
        %42 = math.rsqrt %41 : vector<1x128xf32>
        %43 = arith.mulf %38, %42 : vector<1x128xf32>
        %c0_31 = arith.constant 0 : index
        %c0_32 = arith.constant 0 : index
        %44 = vector.load %arg10[%c0_31, %c0_32] : memref<1x128xf32, #tpu.memory_space<vmem>>, vector<1x128xf32>
        tpu.vector_store %arg10[%c0_31, %c0_32], %43 {strides = array<i32>} : memref<1x128xf32, #tpu.memory_space<vmem>>, vector<1x128xf32>,
        %45 = arith.mulf %32, %43 : vector<1x128xf32>
        %46 = arith.subf %39, %45 : vector<1x128xf32>
        %c0_33 = arith.constant 0 : index
        %c0_34 = arith.constant 0 : index
        %47 = vector.load %arg11[%c0_33, %c0_34] : memref<1x128xf32, #tpu.memory_space<vmem>>, vector<1x128xf32>
        tpu.vector_store %arg11[%c0_33, %c0_34], %46 {strides = array<i32>} : memref<1x128xf32, #tpu.memory_space<vmem>>, vector<1x128xf32>,
      } else {
      }
    } else {
    }
    %c1_i32 = arith.constant 1 : i32
    %3 = arith.cmpi eq, %arg0, %c1_i32 : i32
    %4 = arith.extui %3 : i1 to i32
    %c0_i32_1 = arith.constant 0 : i32
    %5 = arith.cmpi ne, %4, %c0_i32_1 : i32
    scf.if %5 {
      %6 = arith.index_cast %arg1 : i32 to index
      %c0 = arith.constant 0 : index
      %c0_2 = arith.constant 0 : index
      %7 = vector.load %arg7[%6, %c0, %c0_2] : memref<2x256x128xf32, #tpu.memory_space<vmem>>, vector<1x256x128xf32>
      %8 = vector.shape_cast %7 : vector<1x256x128xf32> to vector<256x128xf32>
      %c0_3 = arith.constant 0 : index
      %c0_4 = arith.constant 0 : index
      %9 = vector.load %arg10[%c0_3, %c0_4] : memref<1x128xf32, #tpu.memory_space<vmem>>, vector<1x128xf32>
      %10 = vector.broadcast %9 : vector<1x128xf32> to vector<256x128xf32>
      %11 = arith.mulf %8, %10 : vector<256x128xf32>
      %c0_5 = arith.constant 0 : index
      %c0_6 = arith.constant 0 : index
      %12 = vector.load %arg11[%c0_5, %c0_6] : memref<1x128xf32, #tpu.memory_space<vmem>>, vector<1x128xf32>
      %13 = vector.broadcast %12 : vector<1x128xf32> to vector<256x128xf32>
      %14 = arith.addf %11, %13 : vector<256x128xf32>
      %c0_7 = arith.constant 0 : index
      %c0_8 = arith.constant 0 : index
      %15 = vector.load %arg4[%c0_7, %c0_8] : memref<256x128xf32, #tpu.memory_space<vmem>>, vector<256x128xf32>
      %16 = arith.addf %14, %15 : vector<256x128xf32>
      %c0_9 = arith.constant 0 : index
      %c0_10 = arith.constant 0 : index
      %17 = vector.load %arg6[%c0_9, %c0_10] : memref<256x128xf32, #tpu.memory_space<vmem>>, vector<256x128xf32>
      tpu.vector_store %arg6[%c0_9, %c0_10], %16 {strides = array<i32>} : memref<256x128xf32, #tpu.memory_space<vmem>>, vector<256x128xf32>,
    } else {
    }
    return
  }
  func.func @transform_0(%arg0: i32, %arg1: i32) -> (i32, i32) {
    %c1_i32 = arith.constant 1 : i32
    %0 = arith.subi %c1_i32, %arg0 : i32
    %1 = arith.muli %0, %arg1 : i32
    %c1_i32_0 = arith.constant 1 : i32
    %2 = arith.muli %arg0, %c1_i32_0 : i32
    %3 = arith.addi %1, %2 : i32
    %c0_i32 = arith.constant 0 : i32
    %c0_i32_1 = arith.constant 0 : i32
    return %3, %c0_i32 : i32, i32
  }
  func.func @transform_1(%arg0: i32, %arg1: i32) -> (i32, i32) {
    %c0_i32 = arith.constant 0 : i32
    %c0_i32_0 = arith.constant 0 : i32
    %c0_i32_1 = arith.constant 0 : i32
    return %c0_i32, %c0_i32_0 : i32, i32
  }
  func.func @transform_2(%arg0: i32, %arg1: i32) -> (i32, i32) {
    %0 = arith.muli %arg0, %arg1 : i32
    %c0_i32 = arith.constant 0 : i32
    %c0_i32_0 = arith.constant 0 : i32
    return %0, %c0_i32 : i32, i32
  }
  func.func @transform_3(%arg0: i32, %arg1: i32) -> (i32, i32) {
    %c0_i32 = arith.constant 0 : i32
    %c0_i32_0 = arith.constant 0 : i32
    %c0_i32_1 = arith.constant 0 : i32
    return %c0_i32, %c0_i32_0 : i32, i32
  }
  func.func @transform_4(%arg0: i32, %arg1: i32) -> (i32, i32) {
    %0 = arith.muli %arg0, %arg1 : i32
    %c0_i32 = arith.constant 0 : i32
    %c0_i32_0 = arith.constant 0 : i32
    return %0, %c0_i32 : i32, i32
  }
}

</mosaic_0001>

<llo_original>
// kernel: tpu_custom_call.1
$region0: #{tpu_custom_call.1}
  #allocation0 [shape = 'u32[]', space=smem, size = 0x4, offset = 0x4, fixed_abs, tag = 'smem constant byte address 0x4 - core index']
  #allocation1 [shape = 'u32[144,128]{1,0:T(1,128)}', space=vmem, size = 0x12000, scoped, tag = 'internal scratch']
  #allocation2 [shape = 'f32[2,256,128]{2,1,0:T(8,128)}', space=vmem, size = 0x40000, scoped, tag = 'scratch operand']
  #allocation3 [shape = 'f32[1,128]{1,0:T(1,128)}', space=vmem, size = 0x200, scoped, tag = 'scratch operand']
  #allocation4 [shape = 'f32[1,128]{1,0:T(1,128)}', space=vmem, size = 0x200, scoped, tag = 'scratch operand']
  #allocation5 [shape = 'f32[1,128]{1,0:T(1,128)}', space=vmem, size = 0x200, scoped, tag = 'scratch operand']
  #allocation6 [shape = 'f32[1,128]{1,0:T(1,128)}', space=vmem, size = 0x200, scoped, tag = 'scratch operand']
  %s0 = inlined_call_operand.vmem [shape: bf16[512,64], index: 0, kind: input, shape index: {}]
  %s1 = inlined_call_operand.vmem [shape: bf16[64,128], index: 1, kind: input, shape index: {}]
  %s2 = inlined_call_operand.hbm [shape: f32[512,128], index: 2, kind: input, shape index: {}]
  %s3 = inlined_call_operand.vmem [shape: f32[2,128], index: 3, kind: input, shape index: {}]
  %s4 = inlined_call_operand.hbm [shape: f32[512,128], index: 4, kind: output, shape index: {}]
  %s5 = sld [smem:[#allocation0]]
  $region69: #{tpu_custom_call.1} parent=0
    _
  %s7 = ssub.s32 1, %s5
  %s8 = scalar_select 0, %s7, %s5
  $region1: #{tpu_custom_call.1} parent=0
    #allocation7 [shape = 'u8[262144]{0}', space=vmem, size = 0x40000, scoped, tag = 'input window, operand 2']
    #allocation8 [shape = 's32[2]{0}', space=sflag, size = 0x8, scoped, tag = 'scoped memory for tpu_custom_call.1']
    #allocation9 [shape = 's32[2]{0}', space=sflag, size = 0x8, scoped, tag = 'scoped memory for tpu_custom_call.1']
    #allocation10 [shape = 'u8[262144]{0}', space=vmem, size = 0x40000, scoped, tag = 'output window, operand 0']
    %9 = vsyncpa [#allocation8], 0
    %s10 = scalar_lea.sflag [#allocation8], 1
    %11 = vsyncpa %s10, 0
    %12 = vsyncpa [#allocation9], 0
    %s13 = scalar_lea.sflag [#allocation9], 1
    %14 = vsyncpa %s13, 0
    loop: start=0, step=1, limit=6
    $region2: #{tpu_custom_call.1} parent=1 // loop_pre_header
      _
    $region3: #{tpu_custom_call.1} parent=1 // loop_header
      %s16 = sphi 0, %s20
      %p17 = scmp.ge.s32.totalorder %s16, 6
      %s23 = sphi 0, %s35
      %s24 = sphi 0, %s31
      %s25 = sphi 0, %s23
      %s26 = sphi 0, %s24
      %s27 = sphi 0, %s25
      %s28 = sphi 0, %s26
      %s44 = sphi 0, %s46
      %s47 = sphi 0, %s44
      %s48 = sphi 0, %s47
      %s64 = sphi 0, %s48
      %s68 = sphi 0, %s68
      %s70 = sphi 0, %s68
      %s71 = sphi 0, %s70
      %s85 = sphi 0, %s71
      %s93 = sphi 0, %s95
      %s96 = sphi 0, %s93
      %s97 = sphi 0, %s96
      %s113 = sphi 0, %s97
      %s117 = sphi 0, %s117
      %s119 = sphi 0, %s117
      %s120 = sphi 0, %s119
      %s134 = sphi 0, %s120
      %s142 = sphi 0, %s144
      %s145 = sphi 0, %s142
      %s146 = sphi 0, %s145
      %s162 = sphi 0, %s146
    $region4: #{tpu_custom_call.1} parent=1 // loop_header_branch
      %19 = sbr.rel (%p17) target = $region8
    $region5: #{tpu_custom_call.1} parent=1 // loop_body
      %s21 = ssub.s32 %s16, 1
      %s22 = ssub.s32 %s16, 2
      %s29 = sadd.s32 1, %s24
      %p30 = scmp.ge.s32.totalorder %s29, 2
      %s31 = scalar_select %p30, 0, %s29
      %s32 = sadd.s32 1, %s23
      %s33 = scalar_select %p30, %s32, %s23
      %p34 = scmp.ge.s32.totalorder %s33, 2
      %s35 = scalar_select %p34, 0, %s33
      %s36 = ssub.s32 1, %s23
      %s37 = smul.u32 %s36, %s24
      %s38 = sadd.s32 %s37, %s23
      %s39 = ssub.s32 1, %s35
      %s40 = smul.u32 %s39, %s31
      %s41 = sadd.s32 %s40, %s35
      %s42 = ssub.s32 %s38, %s41
      %p43 = scmp.eq.s32.totalorder %s42, 0
      %s45 = sadd.s32 %s44, 1
      %s46 = scalar_select %p43, %s44, %s45
      %p49 = pneg %p43
      %p50 = scmp.eq.s32.totalorder %s16, 3
      %p51 = por %p49, %p50
      %p52 = scmp.ne.s32.totalorder %s44, %s47
      %p53 = scmp.eq.s32.totalorder %s16, 0
      %p54 = por %p52, %p53
      %p55 = scmp.ne.s32.totalorder %s44, %s47
      %p56 = scmp.eq.s32.totalorder %s21, 3
      %p57 = por %p55, %p56
      %p58 = scmp.ne.s32.totalorder %s47, %s48
      %p59 = scmp.eq.s32.totalorder %s21, 0
      %p60 = por %p58, %p59
      %p61 = scmp.ne.s32.totalorder %s47, %s48
      %p62 = scmp.eq.s32.totalorder %s22, 3
      %p63 = por %p61, %p62
      %p65 = scmp.ne.s32.totalorder %s48, %s64
      %p66 = scmp.eq.s32.totalorder %s22, 0
      %p67 = por %p65, %p66
      %s69 = sadd.s32 %s68, 1
      %p72 = scmp.eq.s32.totalorder %s16, 3
      %p73 = scmp.ne.s32.totalorder %s68, %s70
      %p74 = scmp.eq.s32.totalorder %s16, 0
      %p75 = por %p73, %p74
      %p76 = scmp.ne.s32.totalorder %s68, %s70
      %p77 = scmp.eq.s32.totalorder %s21, 3
      %p78 = por %p76, %p77
      %p79 = scmp.ne.s32.totalorder %s70, %s71
      %p80 = scmp.eq.s32.totalorder %s21, 0
      %p81 = por %p79, %p80
      %p82 = scmp.ne.s32.totalorder %s70, %s71
      %p83 = scmp.eq.s32.totalorder %s22, 3
      %p84 = por %p82, %p83
      %p86 = scmp.ne.s32.totalorder %s71, %s85
      %p87 = scmp.eq.s32.totalorder %s22, 0
      %p88 = por %p86, %p87
      %s89 = smul.u32 %s23, %s24
      %s90 = smul.u32 %s35, %s31
      %s91 = ssub.s32 %s89, %s90
      %p92 = scmp.eq.s32.totalorder %s91, 0
      %s94 = sadd.s32 %s93, 1
      %s95 = scalar_select %p92, %s93, %s94
      %p98 = pneg %p92
      %p99 = scmp.eq.s32.totalorder %s16, 3
      %p100 = por %p98, %p99
      %p101 = scmp.ne.s32.totalorder %s93, %s96
      %p102 = scmp.eq.s32.totalorder %s16, 0
      %p103 = por %p101, %p102
      %p104 = scmp.ne.s32.totalorder %s93, %s96
      %p105 = scmp.eq.s32.totalorder %s21, 3
      %p106 = por %p104, %p105
      %p107 = scmp.ne.s32.totalorder %s96, %s97
      %p108 = scmp.eq.s32.totalorder %s21, 0
      %p109 = por %p107, %p108
      %p110 = scmp.ne.s32.totalorder %s96, %s97
      %p111 = scmp.eq.s32.totalorder %s22, 3
      %p112 = por %p110, %p111
      %p114 = scmp.ne.s32.totalorder %s97, %s113
      %p115 = scmp.eq.s32.totalorder %s22, 0
      %p116 = por %p114, %p115
      %s118 = sadd.s32 %s117, 1
      %p121 = scmp.eq.s32.totalorder %s16, 3
      %p122 = scmp.ne.s32.totalorder %s117, %s119
      %p123 = scmp.eq.s32.totalorder %s16, 0
      %p124 = por %p122, %p123
      %p125 = scmp.ne.s32.totalorder %s117, %s119
      %p126 = scmp.eq.s32.totalorder %s21, 3
      %p127 = por %p125, %p126
      %p128 = scmp.ne.s32.totalorder %s119, %s120
      %p129 = scmp.eq.s32.totalorder %s21, 0
      %p130 = por %p128, %p129
      %p131 = scmp.ne.s32.totalorder %s119, %s120
      %p132 = scmp.eq.s32.totalorder %s22, 3
      %p133 = por %p131, %p132
      %p135 = scmp.ne.s32.totalorder %s120, %s134
      %p136 = scmp.eq.s32.totalorder %s22, 0
      %p137 = por %p135, %p136
      %s138 = smul.u32 %s23, %s24
      %s139 = smul.u32 %s35, %s31
      %s140 = ssub.s32 %s138, %s139
      %p141 = scmp.eq.s32.totalorder %s140, 0
      %s143 = sadd.s32 %s142, 1
      %s144 = scalar_select %p141, %s142, %s143
      %p147 = pneg %p141
      %p148 = scmp.eq.s32.totalorder %s16, 3
      %p149 = por %p147, %p148
      %p150 = scmp.ne.s32.totalorder %s142, %s145
      %p151 = scmp.eq.s32.totalorder %s16, 0
      %p152 = por %p150, %p151
      %p153 = scmp.ne.s32.totalorder %s142, %s145
      %p154 = scmp.eq.s32.totalorder %s21, 3
      %p155 = por %p153, %p154
      %p156 = scmp.ne.s32.totalorder %s145, %s146
      %p157 = scmp.eq.s32.totalorder %s21, 0
      %p158 = por %p156, %p157
      %p159 = scmp.ne.s32.totalorder %s145, %s146
      %p160 = scmp.eq.s32.totalorder %s22, 3
      %p161 = por %p159, %p160
      %p163 = scmp.ne.s32.totalorder %s146, %s162
      %p164 = scmp.eq.s32.totalorder %s22, 0
      %p165 = por %p163, %p164
      %p166 = scmp.le.s32.totalorder 1, %s16
      %p167 = scmp.lt.s32.totalorder %s16, 5
      %p168 = pnand %p166, %p167
      %p169 = pneg %p168
      // Predicated region
      $region9: #{tpu_custom_call.1} parent=5 // pred_check
        _
      $region10: #{tpu_custom_call.1} parent=5 // pred_check_branch
        %171 = sbr.rel (%p168) target = $region12
      $region11: #{tpu_custom_call.1} parent=5 // pred_region
        %s172 = ssub.s32 %s16, 1
        // Predicated region
        $region13: #{tpu_custom_call.1} parent=11 // pred_check
          %p173 = pneg %p81
        $region14: #{tpu_custom_call.1} parent=11 // pred_check_branch
          %175 = sbr.rel (%p173) target = $region16
        $region15: #{tpu_custom_call.1} parent=11 // pred_region
          _
        $region16: #{tpu_custom_call.1} parent=11 // pred_fallthru
          _
        // Predicated region
        $region17: #{tpu_custom_call.1} parent=11 // pred_check
          %p176 = pneg %p130
        $region18: #{tpu_custom_call.1} parent=11 // pred_check_branch
          %178 = sbr.rel (%p176) target = $region20
        $region19: #{tpu_custom_call.1} parent=11 // pred_region
          _
        $region20: #{tpu_custom_call.1} parent=11 // pred_fallthru
          _
      $region12: #{tpu_custom_call.1} parent=5 // pred_fallthru
        _
      %p179 = scmp.lt.s32.totalorder %s16, 4
      // Predicated region
      $region21: #{tpu_custom_call.1} parent=5 // pred_check
        %p180 = pneg %p179
      $region22: #{tpu_custom_call.1} parent=5 // pred_check_branch
        %182 = sbr.rel (%p180) target = $region24
      $region23: #{tpu_custom_call.1} parent=5 // pred_region
        // Predicated region
        $region25: #{tpu_custom_call.1} parent=23 // pred_check
          %p183 = pneg %p54
        $region26: #{tpu_custom_call.1} parent=23 // pred_check_branch
          %185 = sbr.rel (%p183) target = $region28
        $region27: #{tpu_custom_call.1} parent=23 // pred_region
          %s186 = ssub.s32 1, %s23
          %s187 = smul.u32 %s186, %s24
          %s188 = sadd.s32 %s187, %s23
          %s189 = smul.u32 32, %s188
          %p190 = scmp.lt.s32.totalorder %s189, 63
          %s191 = scalar_select %p190, %s189, 63
          %s192 = smul.addr %s191, 4
          %s193 = scalar_lea.vmem %s0, %s192
          %s194 = ssub.s32 1, %s23
          %s195 = smul.u32 %s194, %s24
          %s196 = sadd.s32 %s195, %s23
          %s197 = smul.u32 32, %s196
        $region28: #{tpu_custom_call.1} parent=23 // pred_fallthru
          _
        // Predicated region
        $region29: #{tpu_custom_call.1} parent=23 // pred_check
          %p198 = pneg %p103
        $region30: #{tpu_custom_call.1} parent=23 // pred_check_branch
          %200 = sbr.rel (%p198) target = $region32
        $region31: #{tpu_custom_call.1} parent=23 // pred_region
          %s201 = sand.u32 %s93, 1
          %s202 = scalar_lea.sflag [#allocation8], %s201
          %s203 = sand.u32 %s93, 1
          %s204 = smul.addr %s203, 256
          %s205 = scalar_lea.vmem [#allocation7], %s204
          %s206 = smul.u32 %s23, %s24
          %s207 = smul.u32 32, %s206
          %s209 = ssub.s32 4096, 4096
          %210 = vsyncadd %s202, %s209
          %s211 = smul.addr %s207, 128
          %s212 = scalar_lea.hbm %s2, %s211
          %s213 = sshll.u32 %s205, 4
          %s214 = int_to_ptr.vmem [resolvable:$true] %s213
          %219 = dma.hbm_to_vmem [thread:$0]  %s212, 4096, %s214, %s202, 128, 128, 8
        $region32: #{tpu_custom_call.1} parent=23 // pred_fallthru
          _
      $region24: #{tpu_custom_call.1} parent=5 // pred_fallthru
        _
      %p220 = scmp.le.s32.totalorder 1, %s16
      %p221 = scmp.lt.s32.totalorder %s16, 5
      %p222 = pnand %p220, %p221
      %p223 = pneg %p222
      // Predicated region
      $region33: #{tpu_custom_call.1} parent=5 // pred_check
        _
      $region34: #{tpu_custom_call.1} parent=5 // pred_check_branch
        %225 = sbr.rel (%p222) target = $region36
      $region35: #{tpu_custom_call.1} parent=5 // pred_region
        %s226 = ssub.s32 %s16, 1
        %s227 = sand.u32 %s96, 1
        %s228 = scalar_lea.sflag [#allocation8], %s227
        %s229 = sand.u32 %s96, 1
        %s230 = smul.addr %s229, 256
        %s231 = scalar_lea.vmem [#allocation7], %s230
        // Predicated region
        $region37: #{tpu_custom_call.1} parent=35 // pred_check
          %p232 = pneg %p109
        $region38: #{tpu_custom_call.1} parent=35 // pred_check_branch
          %234 = sbr.rel (%p232) target = $region40
        $region39: #{tpu_custom_call.1} parent=35 // pred_region
          %235 = dma.done %s228, 4096
        $region40: #{tpu_custom_call.1} parent=35 // pred_fallthru
          _
        %s236 = ssub.s32 1, %s25
        %s237 = smul.u32 %s236, %s26
        %s238 = sadd.s32 %s237, %s25
        %s239 = smul.u32 32, %s238
        %p240 = scmp.lt.s32.totalorder %s239, 63
        %s241 = scalar_select %p240, %s239, 63
        %s242 = smul.addr %s241, 4
        %s243 = scalar_lea.vmem %s0, %s242
        %p244 = pneg %p60
        %p245 = pneg %p57
        %p246 = pneg %p81
        %p247 = pneg %p78
        %s248 = sand.u32 %s96, 1
        %s249 = scalar_lea.sflag [#allocation8], %s248
        %s250 = sand.u32 %s96, 1
        %s251 = smul.addr %s250, 256
        %s252 = scalar_lea.vmem [#allocation7], %s251
        %p253 = pneg %p109
        %p254 = pneg %p106
        %p255 = pneg %p130
        %p256 = pneg %p127
        %p257 = pneg %p158
        %p258 = pneg %p155
        %s259 = sand.u32 %s145, 1
        %s260 = scalar_lea.sflag [#allocation9], %s259
        %s261 = sand.u32 %s145, 1
        %s262 = smul.addr %s261, 256
        %s263 = scalar_lea.vmem [#allocation10], %s262
        %s264 = ssub.s32 1, %s25
        %s265 = smul.u32 %s264, %s26
        %s266 = sadd.s32 %s265, %s25
        %s267 = smul.u32 32, %s266
        %p268 = scmp.lt.s32.totalorder %s267, 63
        %s269 = scalar_select %p268, %s267, 63
        %s270 = smul.addr %s269, 4
        %s271 = scalar_lea.vmem %s0, %s270
        %s272 = ssub.s32 1, %s25
        %s273 = smul.u32 %s272, %s26
        %s274 = sadd.s32 %s273, %s25
        %s275 = smul.u32 32, %s274
        %s276 = smul.u32 %s25, %s26
        %s277 = smul.u32 32, %s276
        %s278 = smul.u32 %s25, %s26
        %s279 = smul.u32 32, %s278
        %p281 = scmp.eq.s32.totalorder %s25, 0
        // Predicated region
        $region41: #{tpu_custom_call.1} parent=35 // pred_check
          %p282 = pneg %p281
        $region42: #{tpu_custom_call.1} parent=35 // pred_check_branch
          %284 = sbr.rel (%p282) target = $region44
        $region43: #{tpu_custom_call.1} parent=35 // pred_region
          %p285 = scmp.eq.s32.totalorder %s26, 0
          // Predicated region
          $region45: #{tpu_custom_call.1} parent=43 // pred_check
            %p286 = pneg %p285
          $region46: #{tpu_custom_call.1} parent=43 // pred_check_branch
            %288 = sbr.rel (%p286) target = $region48
          $region47: #{tpu_custom_call.1} parent=43 // pred_region
            %289 = vst [vmem:[#allocation3] sm:$0x1] 0.0
            %290 = vst [vmem:[#allocation4] sm:$0x1] 0.0
          $region48: #{tpu_custom_call.1} parent=43 // pred_fallthru
            _
          %v291 = vld [vmem:[%s271] sm:$0xf]
          %v292 = vld [vmem:[%s271 + $0x4] sm:$0xf]
          %v293 = vld [vmem:[%s271 + $0x8] sm:$0xf]
          %v294 = vld [vmem:[%s271 + $0xc] sm:$0xf]
          %v295 = vld [vmem:[%s271 + $0x10] sm:$0xf]
          %v296 = vld [vmem:[%s271 + $0x14] sm:$0xf]
          %v297 = vld [vmem:[%s271 + $0x18] sm:$0xf]
          %v298 = vld [vmem:[%s271 + $0x1c] sm:$0xf]
          %v299 = vld [vmem:[%s271 + $0x20] sm:$0xf]
          %v300 = vld [vmem:[%s271 + $0x24] sm:$0xf]
          %v301 = vld [vmem:[%s271 + $0x28] sm:$0xf]
          %v302 = vld [vmem:[%s271 + $0x2c] sm:$0xf]
          %v303 = vld [vmem:[%s271 + $0x30] sm:$0xf]
          %v304 = vld [vmem:[%s271 + $0x34] sm:$0xf]
          %v305 = vld [vmem:[%s271 + $0x38] sm:$0xf]
          %v306 = vld [vmem:[%s271 + $0x3c] sm:$0xf]
          %v307 = vld [vmem:[%s271 + $0x40] sm:$0xf]
          %v308 = vld [vmem:[%s271 + $0x44] sm:$0xf]
          %v309 = vld [vmem:[%s271 + $0x48] sm:$0xf]
          %v310 = vld [vmem:[%s271 + $0x4c] sm:$0xf]
          %v311 = vld [vmem:[%s271 + $0x50] sm:$0xf]
          %v312 = vld [vmem:[%s271 + $0x54] sm:$0xf]
          %v313 = vld [vmem:[%s271 + $0x58] sm:$0xf]
          %v314 = vld [vmem:[%s271 + $0x5c] sm:$0xf]
          %v315 = vld [vmem:[%s271 + $0x60] sm:$0xf]
          %v316 = vld [vmem:[%s271 + $0x64] sm:$0xf]
          %v317 = vld [vmem:[%s271 + $0x68] sm:$0xf]
          %v318 = vld [vmem:[%s271 + $0x6c] sm:$0xf]
          %v319 = vld [vmem:[%s271 + $0x70] sm:$0xf]
          %v320 = vld [vmem:[%s271 + $0x74] sm:$0xf]
          %v321 = vld [vmem:[%s271 + $0x78] sm:$0xf]
          %v322 = vld [vmem:[%s271 + $0x7c] sm:$0xf]
          %v323 = vld [vmem:[%s1] sm:$0xf]
          %v324 = vld [vmem:[%s1 + $0x4] sm:$0xf]
          %v325 = vld [vmem:[%s1 + $0x8] sm:$0xf]
          %v326 = vld [vmem:[%s1 + $0xc] sm:$0xf]
          %v327 = vld [vmem:[%s1 + $0x10] sm:$0xf]
          %v328 = vld [vmem:[%s1 + $0x14] sm:$0xf]
          %v329 = vld [vmem:[%s1 + $0x18] sm:$0xf]
          %v330 = vld [vmem:[%s1 + $0x1c] sm:$0xf]
          %v363 = vunpack.c.l.b16 %v291
          %v364 = vunpack.c.l.b16 %v292
          %v365 = vunpack.c.l.b16 %v293
          %v366 = vunpack.c.l.b16 %v294
          %v367 = vunpack.c.l.b16 %v295
          %v368 = vunpack.c.l.b16 %v296
          %v369 = vunpack.c.l.b16 %v297
          %v370 = vunpack.c.l.b16 %v298
          %v371 = vunpack.c.l.b16 %v299
          %v372 = vunpack.c.l.b16 %v300
          %v373 = vunpack.c.l.b16 %v301
          %v374 = vunpack.c.l.b16 %v302
          %v375 = vunpack.c.l.b16 %v303
          %v376 = vunpack.c.l.b16 %v304
          %v377 = vunpack.c.l.b16 %v305
          %v378 = vunpack.c.l.b16 %v306
          %v379 = vunpack.c.l.b16 %v307
          %v380 = vunpack.c.l.b16 %v308
          %v381 = vunpack.c.l.b16 %v309
          %v382 = vunpack.c.l.b16 %v310
          %v383 = vunpack.c.l.b16 %v311
          %v384 = vunpack.c.l.b16 %v312
          %v385 = vunpack.c.l.b16 %v313
          %v386 = vunpack.c.l.b16 %v314
          %v387 = vunpack.c.l.b16 %v315
          %v388 = vunpack.c.l.b16 %v316
          %v389 = vunpack.c.l.b16 %v317
          %v390 = vunpack.c.l.b16 %v318
          %v391 = vunpack.c.l.b16 %v319
          %v392 = vunpack.c.l.b16 %v320
          %v393 = vunpack.c.l.b16 %v321
          %v394 = vunpack.c.l.b16 %v322
          %v395 = vpack.c.b16 %v364, %v363
          %v396 = vpack.c.b16 %v366, %v365
          %v397 = vpack.c.b16 %v368, %v367
          %v398 = vpack.c.b16 %v370, %v369
          %v399 = vpack.c.b16 %v372, %v371
          %v400 = vpack.c.b16 %v374, %v373
          %v401 = vpack.c.b16 %v376, %v375
          %v402 = vpack.c.b16 %v378, %v377
          %v403 = vpack.c.b16 %v380, %v379
          %v404 = vpack.c.b16 %v382, %v381
          %v405 = vpack.c.b16 %v384, %v383
          %v406 = vpack.c.b16 %v386, %v385
          %v407 = vpack.c.b16 %v388, %v387
          %v408 = vpack.c.b16 %v390, %v389
          %v409 = vpack.c.b16 %v392, %v391
          %v410 = vpack.c.b16 %v394, %v393
          %v419 = vunpack.c.l.b16 %v323
          %v420 = vunpack.c.l.b16 %v324
          %v421 = vunpack.c.l.b16 %v325
          %v422 = vunpack.c.l.b16 %v326
          %v423 = vunpack.c.l.b16 %v327
          %v424 = vunpack.c.l.b16 %v328
          %v425 = vunpack.c.l.b16 %v329
          %v426 = vunpack.c.l.b16 %v330
          %v427 = vpack.c.b16 %v420, %v419
          %v428 = vpack.c.b16 %v422, %v421
          %v429 = vpack.c.b16 %v424, %v423
          %v430 = vpack.c.b16 %v426, %v425
          %vm435 = vcmask 523264
          %v437 = vsel %vm435, %v395, 0
          %v440 = vsel %vm435, %v396, 0
          %v443 = vsel %vm435, %v397, 0
          %v446 = vsel %vm435, %v398, 0
          %v449 = vsel %vm435, %v399, 0
          %v452 = vsel %vm435, %v400, 0
          %v455 = vsel %vm435, %v401, 0
          %v458 = vsel %vm435, %v402, 0
          %v461 = vsel %vm435, %v403, 0
          %v464 = vsel %vm435, %v404, 0
          %v467 = vsel %vm435, %v405, 0
          %v470 = vsel %vm435, %v406, 0
          %v473 = vsel %vm435, %v407, 0
          %v476 = vsel %vm435, %v408, 0
          %v479 = vsel %vm435, %v409, 0
          %v482 = vsel %vm435, %v410, 0
          %484 = vmatprep.subr.bf16.mxu0 0
          %485 = vmatpush1.bf16.msra.mxu0 0
          %486 = vmatprep.subr.bf16.mxu0 0
          %487 = vmatpush1.bf16.msra.mxu0 0
          %488 = vmatprep.subr.bf16.mxu0 0
          %489 = vmatpush1.bf16.msra.mxu0 0
          %490 = vmatprep.subr.bf16.mxu0 0
          %491 = vmatpush1.bf16.msra.mxu0 0
          %492 = vmatprep.subr.bf16.mxu0 0
          %493 = vmatpush1.bf16.msra.mxu0 %v430
          %494 = vmatprep.subr.bf16.mxu0 0
          %495 = vmatpush1.bf16.msra.mxu0 %v429
          %496 = vmatprep.subr.bf16.mxu0 0
          %497 = vmatpush1.bf16.msra.mxu0 %v428
          %498 = vmatprep.subr.bf16.mxu0 0
          %499 = vmatpush1.bf16.msra.mxu0 %v427
          %500 = vmatprep.subr.bf16.mxu0 0
          %501 = vmatpush2.bf16.msra.mxu0 0
          %502 = vmatprep.subr.bf16.mxu0 0
          %503 = vmatpush2.bf16.msra.mxu0 0
          %504 = vmatprep.subr.bf16.mxu0 0
          %505 = vmatpush2.bf16.msra.mxu0 0
          %506 = vmatprep.subr.bf16.mxu0 0
          %507 = vmatpush2.bf16.msra.mxu0 0
          %508 = vmatprep.subr.bf16.mxu0 0
          %509 = vmatpush2.bf16.msra.mxu0 0
          %510 = vmatprep.subr.bf16.mxu0 0
          %511 = vmatpush2.bf16.msra.mxu0 0
          %512 = vmatprep.subr.bf16.mxu0 0
          %513 = vmatpush2.bf16.msra.mxu0 0
          %514 = vmatprep.subr.bf16.mxu0 0
          %515 = vmatpush2.bf16.msra.mxu0 0
          %516 = vmatprep.mubr.bf16.mxu0 0
          %517 = vmatmul.mubr.bf16.gmra.mxu0 %v437
          %v518 = vpop.f32.mrf.mxu0
          %v519 = vadd.f32 0.0, %v518
          %v520 = vpop.f32.mrf.mxu0
          %v521 = vpop.f32.mrf.mxu0
          %v522 = vadd.f32 0.0, %v521
          %v523 = vpop.f32.mrf.mxu0
          %524 = vmatprep.mubr.bf16.mxu0 0
          %525 = vmatmul.mubr.bf16.gmra.mxu0 %v440
          %v526 = vpop.f32.mrf.mxu0
          %v527 = vadd.f32 0.0, %v526
          %v528 = vpop.f32.mrf.mxu0
          %v529 = vpop.f32.mrf.mxu0
          %v530 = vadd.f32 0.0, %v529
          %v531 = vpop.f32.mrf.mxu0
          %532 = vmatprep.mubr.bf16.mxu0 0
          %533 = vmatmul.mubr.bf16.gmra.mxu0 %v443
          %v534 = vpop.f32.mrf.mxu0
          %v535 = vadd.f32 0.0, %v534
          %v536 = vpop.f32.mrf.mxu0
          %v537 = vpop.f32.mrf.mxu0
          %v538 = vadd.f32 0.0, %v537
          %v539 = vpop.f32.mrf.mxu0
          %540 = vmatprep.mubr.bf16.mxu0 0
          %541 = vmatmul.mubr.bf16.gmra.mxu0 %v446
          %v542 = vpop.f32.mrf.mxu0
          %v543 = vadd.f32 0.0, %v542
          %v544 = vpop.f32.mrf.mxu0
          %v545 = vpop.f32.mrf.mxu0
          %v546 = vadd.f32 0.0, %v545
          %v547 = vpop.f32.mrf.mxu0
          %548 = vmatprep.mubr.bf16.mxu0 0
          %549 = vmatmul.mubr.bf16.gmra.mxu0 %v449
          %v550 = vpop.f32.mrf.mxu0
          %v551 = vadd.f32 0.0, %v550
          %v552 = vpop.f32.mrf.mxu0
          %v553 = vpop.f32.mrf.mxu0
          %v554 = vadd.f32 0.0, %v553
          %v555 = vpop.f32.mrf.mxu0
          %556 = vmatprep.mubr.bf16.mxu0 0
          %557 = vmatmul.mubr.bf16.gmra.mxu0 %v452
          %v558 = vpop.f32.mrf.mxu0
          %v559 = vadd.f32 0.0, %v558
          %v560 = vpop.f32.mrf.mxu0
          %v561 = vpop.f32.mrf.mxu0
          %v562 = vadd.f32 0.0, %v561
          %v563 = vpop.f32.mrf.mxu0
          %564 = vmatprep.mubr.bf16.mxu0 0
          %565 = vmatmul.mubr.bf16.gmra.mxu0 %v455
          %v566 = vpop.f32.mrf.mxu0
          %v567 = vadd.f32 0.0, %v566
          %v568 = vpop.f32.mrf.mxu0
          %v569 = vpop.f32.mrf.mxu0
          %v570 = vadd.f32 0.0, %v569
          %v571 = vpop.f32.mrf.mxu0
          %572 = vmatprep.mubr.bf16.mxu0 0
          %573 = vmatmul.mubr.bf16.gmra.mxu0 %v458
          %v574 = vpop.f32.mrf.mxu0
          %v575 = vadd.f32 0.0, %v574
          %v576 = vpop.f32.mrf.mxu0
          %v577 = vpop.f32.mrf.mxu0
          %v578 = vadd.f32 0.0, %v577
          %v579 = vpop.f32.mrf.mxu0
          %580 = vmatprep.mubr.bf16.mxu0 0
          %581 = vmatmul.mubr.bf16.gmra.mxu0 %v461
          %v582 = vpop.f32.mrf.mxu0
          %v583 = vadd.f32 0.0, %v582
          %v584 = vpop.f32.mrf.mxu0
          %v585 = vpop.f32.mrf.mxu0
          %v586 = vadd.f32 0.0, %v585
          %v587 = vpop.f32.mrf.mxu0
          %588 = vmatprep.mubr.bf16.mxu0 0
          %589 = vmatmul.mubr.bf16.gmra.mxu0 %v464
          %v590 = vpop.f32.mrf.mxu0
          %v591 = vadd.f32 0.0, %v590
          %v592 = vpop.f32.mrf.mxu0
          %v593 = vpop.f32.mrf.mxu0
          %v594 = vadd.f32 0.0, %v593
          %v595 = vpop.f32.mrf.mxu0
          %596 = vmatprep.mubr.bf16.mxu0 0
          %597 = vmatmul.mubr.bf16.gmra.mxu0 %v467
          %v598 = vpop.f32.mrf.mxu0
          %v599 = vadd.f32 0.0, %v598
          %v600 = vpop.f32.mrf.mxu0
          %v601 = vpop.f32.mrf.mxu0
          %v602 = vadd.f32 0.0, %v601
          %v603 = vpop.f32.mrf.mxu0
          %604 = vmatprep.mubr.bf16.mxu0 0
          %605 = vmatmul.mubr.bf16.gmra.mxu0 %v470
          %v606 = vpop.f32.mrf.mxu0
          %v607 = vadd.f32 0.0, %v606
          %v608 = vpop.f32.mrf.mxu0
          %v609 = vpop.f32.mrf.mxu0
          %v610 = vadd.f32 0.0, %v609
          %v611 = vpop.f32.mrf.mxu0
          %612 = vmatprep.mubr.bf16.mxu0 0
          %613 = vmatmul.mubr.bf16.gmra.mxu0 %v473
          %v614 = vpop.f32.mrf.mxu0
          %v615 = vadd.f32 0.0, %v614
          %v616 = vpop.f32.mrf.mxu0
          %v617 = vpop.f32.mrf.mxu0
          %v618 = vadd.f32 0.0, %v617
          %v619 = vpop.f32.mrf.mxu0
          %620 = vmatprep.mubr.bf16.mxu0 0
          %621 = vmatmul.mubr.bf16.gmra.mxu0 %v476
          %v622 = vpop.f32.mrf.mxu0
          %v623 = vadd.f32 0.0, %v622
          %v624 = vpop.f32.mrf.mxu0
          %v625 = vpop.f32.mrf.mxu0
          %v626 = vadd.f32 0.0, %v625
          %v627 = vpop.f32.mrf.mxu0
          %628 = vmatprep.mubr.bf16.mxu0 0
          %629 = vmatmul.mubr.bf16.gmra.mxu0 %v479
          %v630 = vpop.f32.mrf.mxu0
          %v631 = vadd.f32 0.0, %v630
          %v632 = vpop.f32.mrf.mxu0
          %v633 = vpop.f32.mrf.mxu0
          %v634 = vadd.f32 0.0, %v633
          %v635 = vpop.f32.mrf.mxu0
          %636 = vmatprep.mubr.bf16.mxu0 0
          %637 = vmatmul.mubr.bf16.gmra.mxu0 %v482
          %v638 = vpop.f32.mrf.mxu0
          %v639 = vadd.f32 0.0, %v638
          %v640 = vpop.f32.mrf.mxu0
          %v641 = vpop.f32.mrf.mxu0
          %v642 = vadd.f32 0.0, %v641
          %v643 = vpop.f32.mrf.mxu0
          %644 = vdwg.mxu0
          %s645 = smul.u32 %s26, 256
          %s646 = scalar_lea.vmem [#allocation2], %s645
          %647 = vst [vmem:[%s646] sm:$0xff] %v519
          %648 = vst [vmem:[%s646 + $0x8] sm:$0xff] %v522
          %649 = vst [vmem:[%s646 + $0x10] sm:$0xff] %v527
          %650 = vst [vmem:[%s646 + $0x18] sm:$0xff] %v530
          %651 = vst [vmem:[%s646 + $0x20] sm:$0xff] %v535
          %652 = vst [vmem:[%s646 + $0x28] sm:$0xff] %v538
          %653 = vst [vmem:[%s646 + $0x30] sm:$0xff] %v543
          %654 = vst [vmem:[%s646 + $0x38] sm:$0xff] %v546
          %655 = vst [vmem:[%s646 + $0x40] sm:$0xff] %v551
          %656 = vst [vmem:[%s646 + $0x48] sm:$0xff] %v554
          %657 = vst [vmem:[%s646 + $0x50] sm:$0xff] %v559
          %658 = vst [vmem:[%s646 + $0x58] sm:$0xff] %v562
          %659 = vst [vmem:[%s646 + $0x60] sm:$0xff] %v567
          %660 = vst [vmem:[%s646 + $0x68] sm:$0xff] %v570
          %661 = vst [vmem:[%s646 + $0x70] sm:$0xff] %v575
          %662 = vst [vmem:[%s646 + $0x78] sm:$0xff] %v578
          %663 = vst [vmem:[%s646 + $0x80] sm:$0xff] %v583
          %664 = vst [vmem:[%s646 + $0x88] sm:$0xff] %v586
          %665 = vst [vmem:[%s646 + $0x90] sm:$0xff] %v591
          %666 = vst [vmem:[%s646 + $0x98] sm:$0xff] %v594
          %667 = vst [vmem:[%s646 + $0xa0] sm:$0xff] %v599
          %668 = vst [vmem:[%s646 + $0xa8] sm:$0xff] %v602
          %669 = vst [vmem:[%s646 + $0xb0] sm:$0xff] %v607
          %670 = vst [vmem:[%s646 + $0xb8] sm:$0xff] %v610
          %671 = vst [vmem:[%s646 + $0xc0] sm:$0xff] %v615
          %672 = vst [vmem:[%s646 + $0xc8] sm:$0xff] %v618
          %673 = vst [vmem:[%s646 + $0xd0] sm:$0xff] %v623
          %674 = vst [vmem:[%s646 + $0xd8] sm:$0xff] %v626
          %675 = vst [vmem:[%s646 + $0xe0] sm:$0xff] %v631
          %676 = vst [vmem:[%s646 + $0xe8] sm:$0xff] %v634
          %677 = vst [vmem:[%s646 + $0xf0] sm:$0xff] %v639
          %678 = vst [vmem:[%s646 + $0xf8] sm:$0xff] %v642
          %v679 = vld [vmem:[#allocation3] sm:$0x1]
          %v680 = vadd.f32 %v519, %v522
          %v681 = vadd.f32 %v680, %v527
          %v682 = vadd.f32 %v681, %v530
          %v683 = vadd.f32 %v682, %v535
          %v684 = vadd.f32 %v683, %v538
          %v685 = vadd.f32 %v684, %v543
          %v686 = vadd.f32 %v685, %v546
          %v687 = vadd.f32 %v686, %v551
          %v688 = vadd.f32 %v687, %v554
          %v689 = vadd.f32 %v688, %v559
          %v690 = vadd.f32 %v689, %v562
          %v691 = vadd.f32 %v690, %v567
          %v692 = vadd.f32 %v691, %v570
          %v693 = vadd.f32 %v692, %v575
          %v694 = vadd.f32 %v693, %v578
          %v695 = vadd.f32 %v694, %v583
          %v696 = vadd.f32 %v695, %v586
          %v697 = vadd.f32 %v696, %v591
          %v698 = vadd.f32 %v697, %v594
          %v699 = vadd.f32 %v698, %v599
          %v700 = vadd.f32 %v699, %v602
          %v701 = vadd.f32 %v700, %v607
          %v702 = vadd.f32 %v701, %v610
          %v703 = vadd.f32 %v702, %v615
          %v704 = vadd.f32 %v703, %v618
          %v705 = vadd.f32 %v704, %v623
          %v706 = vadd.f32 %v705, %v626
          %v707 = vadd.f32 %v706, %v631
          %v708 = vadd.f32 %v707, %v634
          %v709 = vadd.f32 %v708, %v639
          %v710 = vadd.f32 %v709, %v642
          %v711 = vrot.slane %v710, 4
          %v712 = vadd.f32 %v710, %v711
          %v713 = vrot.slane %v712, 2
          %v714 = vadd.f32 %v712, %v713
          %v715 = vrot.slane %v714, 1
          %v716 = vadd.f32 %v714, %v715
          %v717 = vadd.f32 %v679, %v716
          %718 = vst [vmem:[#allocation3] sm:$0x1] %v717
          %v719 = vld [vmem:[#allocation4] sm:$0x1]
          %v720 = vmul.f32 %v519, %v519
          %v721 = vmul.f32 %v522, %v522
          %v722 = vmul.f32 %v527, %v527
          %v723 = vmul.f32 %v530, %v530
          %v724 = vmul.f32 %v535, %v535
          %v725 = vmul.f32 %v538, %v538
          %v726 = vmul.f32 %v543, %v543
          %v727 = vmul.f32 %v546, %v546
          %v728 = vmul.f32 %v551, %v551
          %v729 = vmul.f32 %v554, %v554
          %v730 = vmul.f32 %v559, %v559
          %v731 = vmul.f32 %v562, %v562
          %v732 = vmul.f32 %v567, %v567
          %v733 = vmul.f32 %v570, %v570
          %v734 = vmul.f32 %v575, %v575
          %v735 = vmul.f32 %v578, %v578
          %v736 = vmul.f32 %v583, %v583
          %v737 = vmul.f32 %v586, %v586
          %v738 = vmul.f32 %v591, %v591
          %v739 = vmul.f32 %v594, %v594
          %v740 = vmul.f32 %v599, %v599
          %v741 = vmul.f32 %v602, %v602
          %v742 = vmul.f32 %v607, %v607
          %v743 = vmul.f32 %v610, %v610
          %v744 = vmul.f32 %v615, %v615
          %v745 = vmul.f32 %v618, %v618
          %v746 = vmul.f32 %v623, %v623
          %v747 = vmul.f32 %v626, %v626
          %v748 = vmul.f32 %v631, %v631
          %v749 = vmul.f32 %v634, %v634
          %v750 = vmul.f32 %v639, %v639
          %v751 = vmul.f32 %v642, %v642
          %v752 = vadd.f32 %v720, %v721
          %v753 = vadd.f32 %v752, %v722
          %v754 = vadd.f32 %v753, %v723
          %v755 = vadd.f32 %v754, %v724
          %v756 = vadd.f32 %v755, %v725
          %v757 = vadd.f32 %v756, %v726
          %v758 = vadd.f32 %v757, %v727
          %v759 = vadd.f32 %v758, %v728
          %v760 = vadd.f32 %v759, %v729
          %v761 = vadd.f32 %v760, %v730
          %v762 = vadd.f32 %v761, %v731
          %v763 = vadd.f32 %v762, %v732
          %v764 = vadd.f32 %v763, %v733
          %v765 = vadd.f32 %v764, %v734
          %v766 = vadd.f32 %v765, %v735
          %v767 = vadd.f32 %v766, %v736
          %v768 = vadd.f32 %v767, %v737
          %v769 = vadd.f32 %v768, %v738
          %v770 = vadd.f32 %v769, %v739
          %v771 = vadd.f32 %v770, %v740
          %v772 = vadd.f32 %v771, %v741
          %v773 = vadd.f32 %v772, %v742
          %v774 = vadd.f32 %v773, %v743
          %v775 = vadd.f32 %v774, %v744
          %v776 = vadd.f32 %v775, %v745
          %v777 = vadd.f32 %v776, %v746
          %v778 = vadd.f32 %v777, %v747
          %v779 = vadd.f32 %v778, %v748
          %v780 = vadd.f32 %v779, %v749
          %v781 = vadd.f32 %v780, %v750
          %v782 = vadd.f32 %v781, %v751
          %v783 = vrot.slane %v782, 4
          %v784 = vadd.f32 %v782, %v783
          %v785 = vrot.slane %v784, 2
          %v786 = vadd.f32 %v784, %v785
          %v787 = vrot.slane %v786, 1
          %v788 = vadd.f32 %v786, %v787
          %v789 = vadd.f32 %v719, %v788
          %790 = vst [vmem:[#allocation4] sm:$0x1] %v789
          %p791 = scmp.eq.s32.totalorder %s26, 1
          // Predicated region
          $region49: #{tpu_custom_call.1} parent=43 // pred_check
            %p792 = pneg %p791
          $region50: #{tpu_custom_call.1} parent=43 // pred_check_branch
            %794 = sbr.rel (%p792) target = $region52
          $region51: #{tpu_custom_call.1} parent=43 // pred_region
            %v795 = vld [vmem:[#allocation3] sm:$0x1]
            %v796 = vmul.f32 %v795, 0.001953125
            %v797 = vld [vmem:[#allocation4] sm:$0x1]
            %v798 = vmul.f32 %v797, 0.001953125
            %v799 = vmul.f32 %v796, %v796
            %v800 = vsub.f32 %v798, %v799
            %v801 = vld [vmem:[%s3] sm:$0x1]
            %v802 = vld [vmem:[%s3 + $0x1] sm:$0x1]
            %v803 = vadd.f32 %v800, 1e-05
            %v804 = vrsqrt.pop %v803
            %v805 = vmul.f32 %v801, %v804
            %806 = vst [vmem:[#allocation5] sm:$0x1] %v805
            %v807 = vmul.f32 %v796, %v805
            %v808 = vsub.f32 %v802, %v807
            %809 = vst [vmem:[#allocation6] sm:$0x1] %v808
          $region52: #{tpu_custom_call.1} parent=43 // pred_fallthru
            _
        $region44: #{tpu_custom_call.1} parent=35 // pred_fallthru
          _
        %p810 = scmp.eq.s32.totalorder %s25, 1
        // Predicated region
        $region53: #{tpu_custom_call.1} parent=35 // pred_check
          %p811 = pneg %p810
        $region54: #{tpu_custom_call.1} parent=35 // pred_check_branch
          %813 = sbr.rel (%p811) target = $region56
        $region55: #{tpu_custom_call.1} parent=35 // pred_region
          %s814 = smul.u32 %s26, 256
          %s815 = scalar_lea.vmem [#allocation2], %s814
          %v816 = vld [vmem:[%s815] sm:$0xff]
          %v817 = vld [vmem:[%s815 + $0x8] sm:$0xff]
          %v818 = vld [vmem:[%s815 + $0x10] sm:$0xff]
          %v819 = vld [vmem:[%s815 + $0x18] sm:$0xff]
          %v820 = vld [vmem:[%s815 + $0x20] sm:$0xff]
          %v821 = vld [vmem:[%s815 + $0x28] sm:$0xff]
          %v822 = vld [vmem:[%s815 + $0x30] sm:$0xff]
          %v823 = vld [vmem:[%s815 + $0x38] sm:$0xff]
          %v824 = vld [vmem:[%s815 + $0x40] sm:$0xff]
          %v825 = vld [vmem:[%s815 + $0x48] sm:$0xff]
          %v826 = vld [vmem:[%s815 + $0x50] sm:$0xff]
          %v827 = vld [vmem:[%s815 + $0x58] sm:$0xff]
          %v828 = vld [vmem:[%s815 + $0x60] sm:$0xff]
          %v829 = vld [vmem:[%s815 + $0x68] sm:$0xff]
          %v830 = vld [vmem:[%s815 + $0x70] sm:$0xff]
          %v831 = vld [vmem:[%s815 + $0x78] sm:$0xff]
          %v832 = vld [vmem:[%s815 + $0x80] sm:$0xff]
          %v833 = vld [vmem:[%s815 + $0x88] sm:$0xff]
          %v834 = vld [vmem:[%s815 + $0x90] sm:$0xff]
          %v835 = vld [vmem:[%s815 + $0x98] sm:$0xff]
          %v836 = vld [vmem:[%s815 + $0xa0] sm:$0xff]
          %v837 = vld [vmem:[%s815 + $0xa8] sm:$0xff]
          %v838 = vld [vmem:[%s815 + $0xb0] sm:$0xff]
          %v839 = vld [vmem:[%s815 + $0xb8] sm:$0xff]
          %v840 = vld [vmem:[%s815 + $0xc0] sm:$0xff]
          %v841 = vld [vmem:[%s815 + $0xc8] sm:$0xff]
          %v842 = vld [vmem:[%s815 + $0xd0] sm:$0xff]
          %v843 = vld [vmem:[%s815 + $0xd8] sm:$0xff]
          %v844 = vld [vmem:[%s815 + $0xe0] sm:$0xff]
          %v845 = vld [vmem:[%s815 + $0xe8] sm:$0xff]
          %v846 = vld [vmem:[%s815 + $0xf0] sm:$0xff]
          %v847 = vld [vmem:[%s815 + $0xf8] sm:$0xff]
          %v848 = vld [vmem:[#allocation5] sm:$0x1]
          %v850 = vlaneseq
          %v851 = vshrl.u32 %v850, 7
          %v852 = vsub.s32 0, %v851
          %v853 = vrot.slane %v848, %v852
          %v855 = vmul.f32 %v816, %v853
          %v856 = vmul.f32 %v817, %v853
          %v857 = vmul.f32 %v818, %v853
          %v858 = vmul.f32 %v819, %v853
          %v859 = vmul.f32 %v820, %v853
          %v860 = vmul.f32 %v821, %v853
          %v861 = vmul.f32 %v822, %v853
          %v862 = vmul.f32 %v823, %v853
          %v863 = vmul.f32 %v824, %v853
          %v864 = vmul.f32 %v825, %v853
          %v865 = vmul.f32 %v826, %v853
          %v866 = vmul.f32 %v827, %v853
          %v867 = vmul.f32 %v828, %v853
          %v868 = vmul.f32 %v829, %v853
          %v869 = vmul.f32 %v830, %v853
          %v870 = vmul.f32 %v831, %v853
          %v871 = vmul.f32 %v832, %v853
          %v872 = vmul.f32 %v833, %v853
          %v873 = vmul.f32 %v834, %v853
          %v874 = vmul.f32 %v835, %v853
          %v875 = vmul.f32 %v836, %v853
          %v876 = vmul.f32 %v837, %v853
          %v877 = vmul.f32 %v838, %v853
          %v878 = vmul.f32 %v839, %v853
          %v879 = vmul.f32 %v840, %v853
          %v880 = vmul.f32 %v841, %v853
          %v881 = vmul.f32 %v842, %v853
          %v882 = vmul.f32 %v843, %v853
          %v883 = vmul.f32 %v844, %v853
          %v884 = vmul.f32 %v845, %v853
          %v885 = vmul.f32 %v846, %v853
          %v886 = vmul.f32 %v847, %v853
          %v887 = vld [vmem:[#allocation6] sm:$0x1]
          %v889 = vlaneseq
          %v890 = vshrl.u32 %v889, 7
          %v891 = vsub.s32 0, %v890
          %v892 = vrot.slane %v887, %v891
          %v894 = vadd.f32 %v855, %v892
          %v895 = vadd.f32 %v856, %v892
          %v896 = vadd.f32 %v857, %v892
          %v897 = vadd.f32 %v858, %v892
          %v898 = vadd.f32 %v859, %v892
          %v899 = vadd.f32 %v860, %v892
          %v900 = vadd.f32 %v861, %v892
          %v901 = vadd.f32 %v862, %v892
          %v902 = vadd.f32 %v863, %v892
          %v903 = vadd.f32 %v864, %v892
          %v904 = vadd.f32 %v865, %v892
          %v905 = vadd.f32 %v866, %v892
          %v906 = vadd.f32 %v867, %v892
          %v907 = vadd.f32 %v868, %v892
          %v908 = vadd.f32 %v869, %v892
          %v909 = vadd.f32 %v870, %v892
          %v910 = vadd.f32 %v871, %v892
          %v911 = vadd.f32 %v872, %v892
          %v912 = vadd.f32 %v873, %v892
          %v913 = vadd.f32 %v874, %v892
          %v914 = vadd.f32 %v875, %v892
          %v915 = vadd.f32 %v876, %v892
          %v916 = vadd.f32 %v877, %v892
          %v917 = vadd.f32 %v878, %v892
          %v918 = vadd.f32 %v879, %v892
          %v919 = vadd.f32 %v880, %v892
          %v920 = vadd.f32 %v881, %v892
          %v921 = vadd.f32 %v882, %v892
          %v922 = vadd.f32 %v883, %v892
          %v923 = vadd.f32 %v884, %v892
          %v924 = vadd.f32 %v885, %v892
          %v925 = vadd.f32 %v886, %v892
          %v926 = vld [vmem:[%s231] sm:$0xff]
          %v927 = vld [vmem:[%s231 + $0x8] sm:$0xff]
          %v928 = vld [vmem:[%s231 + $0x10] sm:$0xff]
          %v929 = vld [vmem:[%s231 + $0x18] sm:$0xff]
          %v930 = vld [vmem:[%s231 + $0x20] sm:$0xff]
          %v931 = vld [vmem:[%s231 + $0x28] sm:$0xff]
          %v932 = vld [vmem:[%s231 + $0x30] sm:$0xff]
          %v933 = vld [vmem:[%s231 + $0x38] sm:$0xff]
          %v934 = vld [vmem:[%s231 + $0x40] sm:$0xff]
          %v935 = vld [vmem:[%s231 + $0x48] sm:$0xff]
          %v936 = vld [vmem:[%s231 + $0x50] sm:$0xff]
          %v937 = vld [vmem:[%s231 + $0x58] sm:$0xff]
          %v938 = vld [vmem:[%s231 + $0x60] sm:$0xff]
          %v939 = vld [vmem:[%s231 + $0x68] sm:$0xff]
          %v940 = vld [vmem:[%s231 + $0x70] sm:$0xff]
          %v941 = vld [vmem:[%s231 + $0x78] sm:$0xff]
          %v942 = vld [vmem:[%s231 + $0x80] sm:$0xff]
          %v943 = vld [vmem:[%s231 + $0x88] sm:$0xff]
          %v944 = vld [vmem:[%s231 + $0x90] sm:$0xff]
          %v945 = vld [vmem:[%s231 + $0x98] sm:$0xff]
          %v946 = vld [vmem:[%s231 + $0xa0] sm:$0xff]
          %v947 = vld [vmem:[%s231 + $0xa8] sm:$0xff]
          %v948 = vld [vmem:[%s231 + $0xb0] sm:$0xff]
          %v949 = vld [vmem:[%s231 + $0xb8] sm:$0xff]
          %v950 = vld [vmem:[%s231 + $0xc0] sm:$0xff]
          %v951 = vld [vmem:[%s231 + $0xc8] sm:$0xff]
          %v952 = vld [vmem:[%s231 + $0xd0] sm:$0xff]
          %v953 = vld [vmem:[%s231 + $0xd8] sm:$0xff]
          %v954 = vld [vmem:[%s231 + $0xe0] sm:$0xff]
          %v955 = vld [vmem:[%s231 + $0xe8] sm:$0xff]
          %v956 = vld [vmem:[%s231 + $0xf0] sm:$0xff]
          %v957 = vld [vmem:[%s231 + $0xf8] sm:$0xff]
          %v958 = vadd.f32 %v894, %v926
          %v959 = vadd.f32 %v895, %v927
          %v960 = vadd.f32 %v896, %v928
          %v961 = vadd.f32 %v897, %v929
          %v962 = vadd.f32 %v898, %v930
          %v963 = vadd.f32 %v899, %v931
          %v964 = vadd.f32 %v900, %v932
          %v965 = vadd.f32 %v901, %v933
          %v966 = vadd.f32 %v902, %v934
          %v967 = vadd.f32 %v903, %v935
          %v968 = vadd.f32 %v904, %v936
          %v969 = vadd.f32 %v905, %v937
          %v970 = vadd.f32 %v906, %v938
          %v971 = vadd.f32 %v907, %v939
          %v972 = vadd.f32 %v908, %v940
          %v973 = vadd.f32 %v909, %v941
          %v974 = vadd.f32 %v910, %v942
          %v975 = vadd.f32 %v911, %v943
          %v976 = vadd.f32 %v912, %v944
          %v977 = vadd.f32 %v913, %v945
          %v978 = vadd.f32 %v914, %v946
          %v979 = vadd.f32 %v915, %v947
          %v980 = vadd.f32 %v916, %v948
          %v981 = vadd.f32 %v917, %v949
          %v982 = vadd.f32 %v918, %v950
          %v983 = vadd.f32 %v919, %v951
          %v984 = vadd.f32 %v920, %v952
          %v985 = vadd.f32 %v921, %v953
          %v986 = vadd.f32 %v922, %v954
          %v987 = vadd.f32 %v923, %v955
          %v988 = vadd.f32 %v924, %v956
          %v989 = vadd.f32 %v925, %v957
          %990 = vst [vmem:[%s263] sm:$0xff] %v958
          %991 = vst [vmem:[%s263 + $0x8] sm:$0xff] %v959
          %992 = vst [vmem:[%s263 + $0x10] sm:$0xff] %v960
          %993 = vst [vmem:[%s263 + $0x18] sm:$0xff] %v961
          %994 = vst [vmem:[%s263 + $0x20] sm:$0xff] %v962
          %995 = vst [vmem:[%s263 + $0x28] sm:$0xff] %v963
          %996 = vst [vmem:[%s263 + $0x30] sm:$0xff] %v964
          %997 = vst [vmem:[%s263 + $0x38] sm:$0xff] %v965
          %998 = vst [vmem:[%s263 + $0x40] sm:$0xff] %v966
          %999 = vst [vmem:[%s263 + $0x48] sm:$0xff] %v967
          %1000 = vst [vmem:[%s263 + $0x50] sm:$0xff] %v968
          %1001 = vst [vmem:[%s263 + $0x58] sm:$0xff] %v969
          %1002 = vst [vmem:[%s263 + $0x60] sm:$0xff] %v970
          %1003 = vst [vmem:[%s263 + $0x68] sm:$0xff] %v971
          %1004 = vst [vmem:[%s263 + $0x70] sm:$0xff] %v972
          %1005 = vst [vmem:[%s263 + $0x78] sm:$0xff] %v973
          %1006 = vst [vmem:[%s263 + $0x80] sm:$0xff] %v974
          %1007 = vst [vmem:[%s263 + $0x88] sm:$0xff] %v975
          %1008 = vst [vmem:[%s263 + $0x90] sm:$0xff] %v976
          %1009 = vst [vmem:[%s263 + $0x98] sm:$0xff] %v977
          %1010 = vst [vmem:[%s263 + $0xa0] sm:$0xff] %v978
          %1011 = vst [vmem:[%s263 + $0xa8] sm:$0xff] %v979
          %1012 = vst [vmem:[%s263 + $0xb0] sm:$0xff] %v980
          %1013 = vst [vmem:[%s263 + $0xb8] sm:$0xff] %v981
          %1014 = vst [vmem:[%s263 + $0xc0] sm:$0xff] %v982
          %1015 = vst [vmem:[%s263 + $0xc8] sm:$0xff] %v983
          %1016 = vst [vmem:[%s263 + $0xd0] sm:$0xff] %v984
          %1017 = vst [vmem:[%s263 + $0xd8] sm:$0xff] %v985
          %1018 = vst [vmem:[%s263 + $0xe0] sm:$0xff] %v986
          %1019 = vst [vmem:[%s263 + $0xe8] sm:$0xff] %v987
          %1020 = vst [vmem:[%s263 + $0xf0] sm:$0xff] %v988
          %1021 = vst [vmem:[%s263 + $0xf8] sm:$0xff] %v989
        $region56: #{tpu_custom_call.1} parent=35 // pred_fallthru
          _
        %s1022 = sand.u32 %s145, 1
        %s1023 = scalar_lea.sflag [#allocation9], %s1022
        %s1024 = sand.u32 %s145, 1
        %s1025 = smul.addr %s1024, 256
        %s1026 = scalar_lea.vmem [#allocation10], %s1025
        // Predicated region
        $region57: #{tpu_custom_call.1} parent=35 // pred_check
          %p1027 = pneg %p155
        $region58: #{tpu_custom_call.1} parent=35 // pred_check_branch
          %1029 = sbr.rel (%p1027) target = $region60
        $region59: #{tpu_custom_call.1} parent=35 // pred_region
          %s1030 = smul.u32 %s25, %s26
          %s1031 = smul.u32 32, %s1030
          %s1033 = ssub.s32 4096, 4096
          %1034 = vsyncadd %s1023, %s1033
          %s1035 = smul.addr %s1031, 128
          %s1036 = scalar_lea.hbm %s4, %s1035
          %s1037 = sshll.u32 %s1026, 4
          %s1038 = int_to_ptr.vmem [resolvable:$true] %s1037
          %1043 = dma.vmem_to_hbm [thread:$0]  %s1038, 4096, %s1036, %s1023, 128, 128, 8
        $region60: #{tpu_custom_call.1} parent=35 // pred_fallthru
          _
      $region36: #{tpu_custom_call.1} parent=5 // pred_fallthru
        _
      %p1044 = scmp.le.s32.totalorder 2, %s16
      // Predicated region
      $region61: #{tpu_custom_call.1} parent=5 // pred_check
        %p1045 = pneg %p1044
      $region62: #{tpu_custom_call.1} parent=5 // pred_check_branch
        %1047 = sbr.rel (%p1045) target = $region64
      $region63: #{tpu_custom_call.1} parent=5 // pred_region
        %s1048 = ssub.s32 %s16, 2
        // Predicated region
        $region65: #{tpu_custom_call.1} parent=63 // pred_check
          %p1049 = pneg %p161
        $region66: #{tpu_custom_call.1} parent=63 // pred_check_branch
          %1051 = sbr.rel (%p1049) target = $region68
        $region67: #{tpu_custom_call.1} parent=63 // pred_region
          %s1052 = sand.u32 %s146, 1
          %s1053 = scalar_lea.sflag [#allocation9], %s1052
          %s1054 = sand.u32 %s146, 1
          %s1055 = smul.addr %s1054, 256
          %s1056 = scalar_lea.vmem [#allocation10], %s1055
          %1057 = dma.done %s1053, 4096
        $region68: #{tpu_custom_call.1} parent=63 // pred_fallthru
          _
      $region64: #{tpu_custom_call.1} parent=5 // pred_fallthru
        _
    $region6: #{tpu_custom_call.1} parent=1 // loop_footer
      %s20 = sadd.s32 1, %s16
    $region7: #{tpu_custom_call.1} parent=1 // loop_footer_branch
      %15 = sbr.rel target = $region3
    $region8: #{tpu_custom_call.1} parent=1 // loop_exit
      _
    %1058 = vsyncpa [#allocation8], 1
    %s1059 = scalar_lea.sflag [#allocation8], 1
    %1060 = vsyncpa %s1059, 1
    %1061 = vsyncpa [#allocation9], 1
    %s1062 = scalar_lea.sflag [#allocation9], 1
    %1063 = vsyncpa %s1062, 1

</llo_original>
